<compile_context>
chip_gen: v6e
topology: v6e:2x2x1
jax: 0.10.0
libtpu: 0.0.40
codegen_flags: <defaults>
</compile_context>

<pallas_src>
import functools

import jax
import jax.numpy as jnp
from jax import lax
from jax.experimental import pallas as pl
from jax.experimental.pallas import tpu as pltpu


def _round_up(x: int, m: int) -> int:
    return ((x + m - 1) // m) * m


def embed_kernel(ids_ref, tok_ref, pos_ref, out_ref, gbuf, *, tokens_per_block):
    # ids_ref: (B*N_pad,) int32 in SMEM (scalar prefetch)
    # tok_ref: (V, D)  token table, resident in VMEM (constant block index)
    # pos_ref: (T, D)  position rows for this token block
    # out_ref: (T, D)  output block
    # gbuf:    (T, D)  float32 gather scratch (f32 accumulate even for bf16 tables)
    i = pl.program_id(0)
    base = i * tokens_per_block

    def gather_row(t, carry):
        row_id = ids_ref[base + t]
        gbuf[pl.ds(t, 1), :] = tok_ref[pl.ds(row_id, 1), :].astype(jnp.float32)
        return carry

    lax.fori_loop(0, tokens_per_block, gather_row, 0, unroll=8)

    out_ref[...] = (gbuf[...] + pos_ref[...].astype(jnp.float32)).astype(out_ref.dtype)


def embed_forward(x, tok_table, pos_table, *, block_tokens=128):
    """x: (B, N) integer ids; tok_table: (V, D); pos_table: (C, D) -> (B, N, D)."""
    B, N = x.shape
    V, D = tok_table.shape
    C, Dp = pos_table.shape
    assert D == Dp, "token/position embedding dims must match"
    if N > C:
        raise ValueError(f"Sequence length {N} exceeds maximum context length {C}")

    # Tokens per grid step: multiple of 8 sublanes, no larger than needed.
    T = min(block_tokens, _round_up(N, 8))
    T = max(8, _round_up(T, 8))
    N_pad = _round_up(N, T)
    nb = N_pad // T
    M_pad = B * N_pad  # total (padded) tokens, flattened

    # Clamp ids so the in-kernel row gather never reads outside the table
    # (PyTorch raises; we clamp — documented divergence). Pad sequence to N_pad.
    ids = jnp.clip(x.astype(jnp.int32), 0, V - 1)
    if N_pad != N:
        ids = jnp.pad(ids, ((0, 0), (0, N_pad - N)))
    ids_flat = ids.reshape(M_pad)  # 1D -> minimal SMEM padding

    # Position rows actually used, padded to N_pad (padded rows are sliced off).
    pos_used = pos_table[:N]
    if N_pad != N:
        pos_used = jnp.pad(pos_used, ((0, N_pad - N), (0, 0)))

    itemsize = jnp.dtype(tok_table.dtype).itemsize
    table_bytes = V * D * itemsize
    # resident table (x2 safety) + double-buffered pos/out blocks + f32 scratch + headroom
    needed = 2 * table_bytes + 4 * T * D * itemsize + T * D * 4 + (8 << 20)
    vmem_limit = int(min(max(needed, 32 << 20), 96 << 20))

    grid_spec = pltpu.PrefetchScalarGridSpec(
        num_scalar_prefetch=1,          # ids -> SMEM, readable in the kernel body
        grid=(M_pad // T,),             # one flattened "parallel" axis
        in_specs=[
            # Token table: constant block index -> DMA'd once, resident in VMEM.
            pl.BlockSpec((V, D), lambda i, ids: (0, 0)),
            # Position rows for this T-token block (repeats every nb steps).
            pl.BlockSpec((T, D), lambda i, ids: (i % nb, 0)),
        ],
        out_specs=pl.BlockSpec((T, D), lambda i, ids: (i, 0)),
        scratch_shapes=[pltpu.VMEM((T, D), jnp.float32)],
    )

    out_flat = pl.pallas_call(
        functools.partial(embed_kernel, tokens_per_block=T),
        out_shape=jax.ShapeDtypeStruct((M_pad, D), tok_table.dtype),
        grid_spec=grid_spec,
        compiler_params=pltpu.CompilerParams(
            dimension_semantics=("parallel",),   # splits across v7x's 2 TCs
            vmem_limit_bytes=vmem_limit,
        ),
    )(ids_flat, tok_table, pos_used)

    out = out_flat.reshape(B, N_pad, D)
    if N_pad != N:
        out = out[:, :N, :]
    return out


if __name__ == "__main__":
    # Small shapes consistent with the module's forward.
    vocab_size = 32
    embed_size = 128
    max_context_len = 16
    batch = 2
    seq = 8

    key = jax.random.PRNGKey(0)
    k_tok, k_pos, k_ids = jax.random.split(key, 3)

    # Deterministic "parameters" (nn.Embedding weights).
    tok_table = jax.random.normal(k_tok, (vocab_size, embed_size), jnp.float32)
    pos_table = jax.random.normal(
        k_pos, (max_context_len, embed_size), jnp.float32
    )

    # Deterministic input token ids, shape (b, n).
    x = jax.random.randint(k_ids, (batch, seq), 0, vocab_size, jnp.int32)

    out = embed_forward(x, tok_table, pos_table)
    out = jax.block_until_ready(out)

    # Pure-JAX reference for correctness.
    ref = tok_table[x] + pos_table[jnp.arange(seq)][None, :, :]
    assert out.shape == (batch, seq, embed_size)
    assert jnp.allclose(out, ref, atol=1e-5, rtol=1e-5)

    print("KERNEL_OK")
</pallas_src>

<mosaic_0001>
module attributes {stable_mosaic.version = 11 : i64} {
  func.func @embed_kernel(%arg0: i32, %arg1: memref<16xi32, #tpu.memory_space<smem>>, %arg2: memref<32x128xf32, #tpu.memory_space<vmem>>, %arg3: memref<8x128xf32, #tpu.memory_space<vmem>>, %arg4: memref<8x128xf32, #tpu.memory_space<vmem>>, %arg5: memref<8x128xf32, #tpu.memory_space<vmem>>) attributes {dimension_semantics = [#tpu.dimension_semantics<parallel>], iteration_bounds = array<i64: 2>, scalar_prefetch = 1 : i64, scratch_operands = 1 : i64, tpu.core_type = #tpu.core_type<tc>, window_params = [{pipeline_mode = #tpu.pipeline_mode<synchronous>, transform_indices = @transform_0, window_bounds = array<i64: 32, 128>}, {transform_indices = @transform_1, window_bounds = array<i64: 8, 128>}, {transform_indices = @transform_2, window_bounds = array<i64: 8, 128>}]} {
    %c8_i32 = arith.constant 8 : i32
    %0 = arith.muli %arg0, %c8_i32 : i32
    %c0_i32 = arith.constant 0 : i32
    %1 = arith.addi %0, %c0_i32 : i32
    %2 = arith.index_cast %1 : i32 to index
    %3 = memref.load %arg1[%2] : memref<16xi32, #tpu.memory_space<smem>>
    %4 = arith.index_cast %3 : i32 to index
    %c0 = arith.constant 0 : index
    %5 = vector.load %arg2[%4, %c0] : memref<32x128xf32, #tpu.memory_space<vmem>>, vector<1x128xf32>
    %6 = arith.index_cast %c0_i32 : i32 to index
    %c0_0 = arith.constant 0 : index
    %7 = vector.load %arg5[%6, %c0_0] : memref<8x128xf32, #tpu.memory_space<vmem>>, vector<1x128xf32>
    tpu.vector_store %arg5[%6, %c0_0], %5 {strides = array<i32>} : memref<8x128xf32, #tpu.memory_space<vmem>>, vector<1x128xf32>,
    %c1_i32 = arith.constant 1 : i32
    %8 = arith.addi %0, %c1_i32 : i32
    %9 = arith.index_cast %8 : i32 to index
    %10 = memref.load %arg1[%9] : memref<16xi32, #tpu.memory_space<smem>>
    %11 = arith.index_cast %10 : i32 to index
    %c0_1 = arith.constant 0 : index
    %12 = vector.load %arg2[%11, %c0_1] : memref<32x128xf32, #tpu.memory_space<vmem>>, vector<1x128xf32>
    %13 = arith.index_cast %c1_i32 : i32 to index
    %c0_2 = arith.constant 0 : index
    %14 = vector.load %arg5[%13, %c0_2] : memref<8x128xf32, #tpu.memory_space<vmem>>, vector<1x128xf32>
    tpu.vector_store %arg5[%13, %c0_2], %12 {strides = array<i32>} : memref<8x128xf32, #tpu.memory_space<vmem>>, vector<1x128xf32>,
    %c2_i32 = arith.constant 2 : i32
    %15 = arith.addi %0, %c2_i32 : i32
    %16 = arith.index_cast %15 : i32 to index
    %17 = memref.load %arg1[%16] : memref<16xi32, #tpu.memory_space<smem>>
    %18 = arith.index_cast %17 : i32 to index
    %c0_3 = arith.constant 0 : index
    %19 = vector.load %arg2[%18, %c0_3] : memref<32x128xf32, #tpu.memory_space<vmem>>, vector<1x128xf32>
    %20 = arith.index_cast %c2_i32 : i32 to index
    %c0_4 = arith.constant 0 : index
    %21 = vector.load %arg5[%20, %c0_4] : memref<8x128xf32, #tpu.memory_space<vmem>>, vector<1x128xf32>
    tpu.vector_store %arg5[%20, %c0_4], %19 {strides = array<i32>} : memref<8x128xf32, #tpu.memory_space<vmem>>, vector<1x128xf32>,
    %c3_i32 = arith.constant 3 : i32
    %22 = arith.addi %0, %c3_i32 : i32
    %23 = arith.index_cast %22 : i32 to index
    %24 = memref.load %arg1[%23] : memref<16xi32, #tpu.memory_space<smem>>
    %25 = arith.index_cast %24 : i32 to index
    %c0_5 = arith.constant 0 : index
    %26 = vector.load %arg2[%25, %c0_5] : memref<32x128xf32, #tpu.memory_space<vmem>>, vector<1x128xf32>
    %27 = arith.index_cast %c3_i32 : i32 to index
    %c0_6 = arith.constant 0 : index
    %28 = vector.load %arg5[%27, %c0_6] : memref<8x128xf32, #tpu.memory_space<vmem>>, vector<1x128xf32>
    tpu.vector_store %arg5[%27, %c0_6], %26 {strides = array<i32>} : memref<8x128xf32, #tpu.memory_space<vmem>>, vector<1x128xf32>,
    %c4_i32 = arith.constant 4 : i32
    %29 = arith.addi %0, %c4_i32 : i32
    %30 = arith.index_cast %29 : i32 to index
    %31 = memref.load %arg1[%30] : memref<16xi32, #tpu.memory_space<smem>>
    %32 = arith.index_cast %31 : i32 to index
    %c0_7 = arith.constant 0 : index
    %33 = vector.load %arg2[%32, %c0_7] : memref<32x128xf32, #tpu.memory_space<vmem>>, vector<1x128xf32>
    %34 = arith.index_cast %c4_i32 : i32 to index
    %c0_8 = arith.constant 0 : index
    %35 = vector.load %arg5[%34, %c0_8] : memref<8x128xf32, #tpu.memory_space<vmem>>, vector<1x128xf32>
    tpu.vector_store %arg5[%34, %c0_8], %33 {strides = array<i32>} : memref<8x128xf32, #tpu.memory_space<vmem>>, vector<1x128xf32>,
    %c5_i32 = arith.constant 5 : i32
    %36 = arith.addi %0, %c5_i32 : i32
    %37 = arith.index_cast %36 : i32 to index
    %38 = memref.load %arg1[%37] : memref<16xi32, #tpu.memory_space<smem>>
    %39 = arith.index_cast %38 : i32 to index
    %c0_9 = arith.constant 0 : index
    %40 = vector.load %arg2[%39, %c0_9] : memref<32x128xf32, #tpu.memory_space<vmem>>, vector<1x128xf32>
    %41 = arith.index_cast %c5_i32 : i32 to index
    %c0_10 = arith.constant 0 : index
    %42 = vector.load %arg5[%41, %c0_10] : memref<8x128xf32, #tpu.memory_space<vmem>>, vector<1x128xf32>
    tpu.vector_store %arg5[%41, %c0_10], %40 {strides = array<i32>} : memref<8x128xf32, #tpu.memory_space<vmem>>, vector<1x128xf32>,
    %c6_i32 = arith.constant 6 : i32
    %43 = arith.addi %0, %c6_i32 : i32
    %44 = arith.index_cast %43 : i32 to index
    %45 = memref.load %arg1[%44] : memref<16xi32, #tpu.memory_space<smem>>
    %46 = arith.index_cast %45 : i32 to index
    %c0_11 = arith.constant 0 : index
    %47 = vector.load %arg2[%46, %c0_11] : memref<32x128xf32, #tpu.memory_space<vmem>>, vector<1x128xf32>
    %48 = arith.index_cast %c6_i32 : i32 to index
    %c0_12 = arith.constant 0 : index
    %49 = vector.load %arg5[%48, %c0_12] : memref<8x128xf32, #tpu.memory_space<vmem>>, vector<1x128xf32>
    tpu.vector_store %arg5[%48, %c0_12], %47 {strides = array<i32>} : memref<8x128xf32, #tpu.memory_space<vmem>>, vector<1x128xf32>,
    %c7_i32 = arith.constant 7 : i32
    %50 = arith.addi %0, %c7_i32 : i32
    %51 = arith.index_cast %50 : i32 to index
    %52 = memref.load %arg1[%51] : memref<16xi32, #tpu.memory_space<smem>>
    %53 = arith.index_cast %52 : i32 to index
    %c0_13 = arith.constant 0 : index
    %54 = vector.load %arg2[%53, %c0_13] : memref<32x128xf32, #tpu.memory_space<vmem>>, vector<1x128xf32>
    %55 = arith.index_cast %c7_i32 : i32 to index
    %c0_14 = arith.constant 0 : index
    %56 = vector.load %arg5[%55, %c0_14] : memref<8x128xf32, #tpu.memory_space<vmem>>, vector<1x128xf32>
    tpu.vector_store %arg5[%55, %c0_14], %54 {strides = array<i32>} : memref<8x128xf32, #tpu.memory_space<vmem>>, vector<1x128xf32>,
    %c8_i32_15 = arith.constant 8 : i32
    %c0_16 = arith.constant 0 : index
    %c0_17 = arith.constant 0 : index
    %57 = vector.load %arg5[%c0_16, %c0_17] : memref<8x128xf32, #tpu.memory_space<vmem>>, vector<8x128xf32>
    %c0_18 = arith.constant 0 : index
    %c0_19 = arith.constant 0 : index
    %58 = vector.load %arg3[%c0_18, %c0_19] : memref<8x128xf32, #tpu.memory_space<vmem>>, vector<8x128xf32>
    %59 = arith.addf %57, %58 : vector<8x128xf32>
    %c0_20 = arith.constant 0 : index
    %c0_21 = arith.constant 0 : index
    %60 = vector.load %arg4[%c0_20, %c0_21] : memref<8x128xf32, #tpu.memory_space<vmem>>, vector<8x128xf32>
    tpu.vector_store %arg4[%c0_20, %c0_21], %59 {strides = array<i32>} : memref<8x128xf32, #tpu.memory_space<vmem>>, vector<8x128xf32>,
    return
  }
  func.func @transform_0(%arg0: i32, %arg1: memref<16xi32, #tpu.memory_space<smem>>) -> (i32, i32) {
    %c0_i32 = arith.constant 0 : i32
    %c0_i32_0 = arith.constant 0 : i32
    %c0_i32_1 = arith.constant 0 : i32
    return %c0_i32, %c0_i32_0 : i32, i32
  }
  func.func @transform_1(%arg0: i32, %arg1: memref<16xi32, #tpu.memory_space<smem>>) -> (i32, i32) {
    %c1_i32 = arith.constant 1 : i32
    %c0_i32 = arith.constant 0 : i32
    %0 = arith.cmpi eq, %c1_i32, %c0_i32 : i32
    %c1_i32_0 = arith.constant 1 : i32
    %1 = arith.select %0, %c1_i32_0, %c1_i32 : i32
    %2 = arith.remsi %arg0, %1 : i32
    %c0_i32_1 = arith.constant 0 : i32
    %3 = arith.cmpi ne, %2, %c0_i32_1 : i32
    %c0_i32_2 = arith.constant 0 : i32
    %4 = arith.cmpi slt, %2, %c0_i32_2 : i32
    %c0_i32_3 = arith.constant 0 : i32
    %5 = arith.cmpi slt, %1, %c0_i32_3 : i32
    %6 = arith.xori %4, %5 : i1
    %7 = arith.andi %6, %3 : i1
    %8 = arith.addi %2, %1 : i32
    %9 = arith.select %7, %8, %2 : i32
    %c0_i32_4 = arith.constant 0 : i32
    %c0_i32_5 = arith.constant 0 : i32
    return %9, %c0_i32_4 : i32, i32
  }
  func.func @transform_2(%arg0: i32, %arg1: memref<16xi32, #tpu.memory_space<smem>>) -> (i32, i32) {
    %c0_i32 = arith.constant 0 : i32
    %c0_i32_0 = arith.constant 0 : i32
    return %arg0, %c0_i32 : i32, i32
  }
}

</mosaic_0001>

<llo_original>
// kernel: tpu_custom_call.1
$region0: #{tpu_custom_call.1}
  #allocation0 [shape = 'u32[]', space=smem, size = 0x4, offset = 0x4, fixed_abs, tag = 'smem constant byte address 0x4 - core index']
  #allocation1 [shape = 'u32[144,128]{1,0:T(1,128)}', space=vmem, size = 0x12000, scoped, tag = 'internal scratch']
  #allocation2 [shape = 'f32[8,128]{1,0:T(8,128)}', space=vmem, size = 0x1000, scoped, tag = 'scratch operand']
  #allocation3 [shape = 's32[1]{0}', space=sflag, size = 0x4, scoped, tag = 'scoped memory for tpu_custom_call.1']
  #allocation4 [shape = 'u8[512]{0}', space=smem, size = 0x200, scoped, tag = 'prefetched SMEM operand 0']
  %s0 = inlined_call_operand.hbm [shape: s32[16], index: 0, kind: input, shape index: {}]
  %s1 = inlined_call_operand.hbm [shape: f32[32,128], index: 1, kind: input, shape index: {}]
  %s2 = inlined_call_operand.hbm [shape: f32[8,128], index: 2, kind: input, shape index: {}]
  %s3 = inlined_call_operand.hbm [shape: f32[16,128], index: 3, kind: output, shape index: {}]
  %s4 = sld [smem:[#allocation0]]
  $region49: #{tpu_custom_call.1} parent=0
    _
  %s6 = ssub.s32 1, %s4
  %s7 = scalar_select 0, %s6, %s4
  %9 = dma.hbm_to_smem %s0, 16, [#allocation4], [#allocation3]
  %10 = dma.done [#allocation3], 16
  %11 = sfence
  $region1: #{tpu_custom_call.1} parent=0
    #allocation5 [shape = 'u8[16384]{0}', space=vmem, size = 0x4000, scoped, tag = 'input window, operand 1, single buffered']
    #allocation6 [shape = 's32[2]{0}', space=sflag, size = 0x8, scoped, tag = 'scoped memory for tpu_custom_call.1']
    #allocation7 [shape = 's32[2]{0}', space=sflag, size = 0x8, scoped, tag = 'scoped memory for tpu_custom_call.1']
    #allocation8 [shape = 'u8[4096]{0}', space=vmem, size = 0x1000, scoped, tag = 'input window, operand 2, single buffered']
    #allocation9 [shape = 's32[1]{0}', space=sflag, size = 0x4, scoped, tag = 'scoped memory for tpu_custom_call.1']
    #allocation10 [shape = 'u8[8192]{0}', space=vmem, size = 0x2000, scoped, tag = 'output window, operand 0']
    %12 = vsyncpa [#allocation6], 0
    %13 = vsyncpa [#allocation9], 0
    %14 = vsyncpa [#allocation7], 0
    %s15 = scalar_lea.sflag [#allocation7], 1
    %16 = vsyncpa %s15, 0
    loop: start=0, step=1, limit=4
    $region2: #{tpu_custom_call.1} parent=1 // loop_pre_header
      _
    $region3: #{tpu_custom_call.1} parent=1 // loop_header
      %s18 = sphi 0, %s22
      %p19 = scmp.ge.s32.totalorder %s18, 4
      %s26 = sphi 0, %s26
      %s28 = sphi 0, %s26
      %s29 = sphi 0, %s28
      %s43 = sphi 0, %s29
      %s47 = sphi 0, %s47
      %s49 = sphi 0, %s47
      %s50 = sphi 0, %s49
      %s64 = sphi 0, %s50
      %s70 = sphi 0, %s72
      %s73 = sphi 0, %s70
      %s74 = sphi 0, %s73
      %s90 = sphi 0, %s74
    $region4: #{tpu_custom_call.1} parent=1 // loop_header_branch
      %21 = sbr.rel (%p19) target = $region8
    $region5: #{tpu_custom_call.1} parent=1 // loop_body
      %s23 = ssub.s32 %s18, 1
      %s24 = ssub.s32 %s18, 2
      %s25 = sadd.s32 %s18, 1
      %s27 = sadd.s32 %s26, 1
      %p30 = scmp.eq.s32.totalorder %s18, 1
      %p31 = scmp.ne.s32.totalorder %s26, %s28
      %p32 = scmp.eq.s32.totalorder %s18, 0
      %p33 = por %p31, %p32
      %p34 = scmp.ne.s32.totalorder %s26, %s28
      %p35 = scmp.eq.s32.totalorder %s23, 1
      %p36 = por %p34, %p35
      %p37 = scmp.ne.s32.totalorder %s28, %s29
      %p38 = scmp.eq.s32.totalorder %s23, 0
      %p39 = por %p37, %p38
      %p40 = scmp.ne.s32.totalorder %s28, %s29
      %p41 = scmp.eq.s32.totalorder %s24, 1
      %p42 = por %p40, %p41
      %p44 = scmp.ne.s32.totalorder %s29, %s43
      %p45 = scmp.eq.s32.totalorder %s24, 0
      %p46 = por %p44, %p45
      %s48 = sadd.s32 %s47, 1
      %p51 = scmp.eq.s32.totalorder %s18, 1
      %p52 = scmp.ne.s32.totalorder %s47, %s49
      %p53 = scmp.eq.s32.totalorder %s18, 0
      %p54 = por %p52, %p53
      %p55 = scmp.ne.s32.totalorder %s47, %s49
      %p56 = scmp.eq.s32.totalorder %s23, 1
      %p57 = por %p55, %p56
      %p58 = scmp.ne.s32.totalorder %s49, %s50
      %p59 = scmp.eq.s32.totalorder %s23, 0
      %p60 = por %p58, %p59
      %p61 = scmp.ne.s32.totalorder %s49, %s50
      %p62 = scmp.eq.s32.totalorder %s24, 1
      %p63 = por %p61, %p62
      %p65 = scmp.ne.s32.totalorder %s50, %s64
      %p66 = scmp.eq.s32.totalorder %s24, 0
      %p67 = por %p65, %p66
      %s68 = ssub.s32 %s18, %s25
      %p69 = scmp.eq.s32.totalorder %s68, 0
      %s71 = sadd.s32 %s70, 1
      %s72 = scalar_select %p69, %s70, %s71
      %p75 = pneg %p69
      %p76 = scmp.eq.s32.totalorder %s18, 1
      %p77 = por %p75, %p76
      %p78 = scmp.ne.s32.totalorder %s70, %s73
      %p79 = scmp.eq.s32.totalorder %s18, 0
      %p80 = por %p78, %p79
      %p81 = scmp.ne.s32.totalorder %s70, %s73
      %p82 = scmp.eq.s32.totalorder %s23, 1
      %p83 = por %p81, %p82
      %p84 = scmp.ne.s32.totalorder %s73, %s74
      %p85 = scmp.eq.s32.totalorder %s23, 0
      %p86 = por %p84, %p85
      %p87 = scmp.ne.s32.totalorder %s73, %s74
      %p88 = scmp.eq.s32.totalorder %s24, 1
      %p89 = por %p87, %p88
      %p91 = scmp.ne.s32.totalorder %s74, %s90
      %p92 = scmp.eq.s32.totalorder %s24, 0
      %p93 = por %p91, %p92
      %p94 = scmp.le.s32.totalorder 1, %s18
      %p95 = scmp.lt.s32.totalorder %s18, 3
      %p96 = pnand %p94, %p95
      %p97 = pneg %p96
      // Predicated region
      $region9: #{tpu_custom_call.1} parent=5 // pred_check
        _
      $region10: #{tpu_custom_call.1} parent=5 // pred_check_branch
        %99 = sbr.rel (%p96) target = $region12
      $region11: #{tpu_custom_call.1} parent=5 // pred_region
        %s100 = ssub.s32 %s18, 1
        // Predicated region
        $region13: #{tpu_custom_call.1} parent=11 // pred_check
          %p101 = pneg %p39
        $region14: #{tpu_custom_call.1} parent=11 // pred_check_branch
          %103 = sbr.rel (%p101) target = $region16
        $region15: #{tpu_custom_call.1} parent=11 // pred_region
          %s105 = ssub.s32 512, 512
          %106 = vsyncadd [#allocation6], %s105
          %s107 = sshll.u32 [#allocation5], 4
          %s108 = int_to_ptr.vmem [resolvable:$true] %s107
          %113 = dma.hbm_to_vmem [thread:$0]  %s1, 512, %s108, [#allocation6], 128, 128, 8
        $region16: #{tpu_custom_call.1} parent=11 // pred_fallthru
          _
        // Predicated region
        $region17: #{tpu_custom_call.1} parent=11 // pred_check
          %p114 = pneg %p60
        $region18: #{tpu_custom_call.1} parent=11 // pred_check_branch
          %116 = sbr.rel (%p114) target = $region20
        $region19: #{tpu_custom_call.1} parent=11 // pred_region
          %s118 = ssub.s32 128, 128
          %119 = vsyncadd [#allocation9], %s118
          %s121 = sshll.u32 [#allocation8], 4
          %s122 = int_to_ptr.vmem [resolvable:$true] %s121
          %124 = dma.hbm_to_vmem [thread:$0]  %s2, 128, %s122, [#allocation9]
        $region20: #{tpu_custom_call.1} parent=11 // pred_fallthru
          _
      $region12: #{tpu_custom_call.1} parent=5 // pred_fallthru
        _
      %p125 = scmp.lt.s32.totalorder %s18, 2
      // Predicated region
      $region21: #{tpu_custom_call.1} parent=5 // pred_check
        %p126 = pneg %p125
      $region22: #{tpu_custom_call.1} parent=5 // pred_check_branch
        %128 = sbr.rel (%p126) target = $region24
      $region23: #{tpu_custom_call.1} parent=5 // pred_region
        _
      $region24: #{tpu_custom_call.1} parent=5 // pred_fallthru
        _
      %p129 = scmp.le.s32.totalorder 1, %s18
      %p130 = scmp.lt.s32.totalorder %s18, 3
      %p131 = pnand %p129, %p130
      %p132 = pneg %p131
      // Predicated region
      $region25: #{tpu_custom_call.1} parent=5 // pred_check
        _
      $region26: #{tpu_custom_call.1} parent=5 // pred_check_branch
        %134 = sbr.rel (%p131) target = $region28
      $region27: #{tpu_custom_call.1} parent=5 // pred_region
        %s135 = ssub.s32 %s18, 1
        // Predicated region
        $region29: #{tpu_custom_call.1} parent=27 // pred_check
          %p136 = pneg %p39
        $region30: #{tpu_custom_call.1} parent=27 // pred_check_branch
          %138 = sbr.rel (%p136) target = $region32
        $region31: #{tpu_custom_call.1} parent=27 // pred_region
          %139 = dma.done [#allocation6], 512
        $region32: #{tpu_custom_call.1} parent=27 // pred_fallthru
          _
        // Predicated region
        $region33: #{tpu_custom_call.1} parent=27 // pred_check
          %p140 = pneg %p60
        $region34: #{tpu_custom_call.1} parent=27 // pred_check_branch
          %142 = sbr.rel (%p140) target = $region36
        $region35: #{tpu_custom_call.1} parent=27 // pred_region
          %143 = dma.done [#allocation9], 128
        $region36: #{tpu_custom_call.1} parent=27 // pred_fallthru
          _
        %p144 = pneg %p39
        %p145 = pneg %p36
        %p146 = pneg %p60
        %p147 = pneg %p57
        %p148 = pneg %p86
        %p149 = pneg %p83
        %s150 = sand.u32 %s73, 1
        %s151 = scalar_lea.sflag [#allocation7], %s150
        %s152 = sand.u32 %s73, 1
        %s153 = smul.addr %s152, 8
        %s154 = scalar_lea.vmem [#allocation10], %s153
        %s155 = smul.u32 %s23, 8
        %s156 = sld [smem:[#allocation4 + %s155]]
        %s157 = scalar_lea.vmem [#allocation5], %s156
        %v158 = vld [vmem:[%s157] sm:$0x1]
        %159 = vst [vmem:[#allocation2] sm:$0x1] %v158
        %s160 = sadd.s32 %s155, 1
        %s161 = sld [smem:[#allocation4 + %s160]]
        %s162 = scalar_lea.vmem [#allocation5], %s161
        %v163 = vld [vmem:[%s162] sm:$0x1]
        %164 = vst [vmem:[#allocation2 + $0x1] sm:$0x1] %v163
        %s165 = sadd.s32 %s155, 2
        %s166 = sld [smem:[#allocation4 + %s165]]
        %s167 = scalar_lea.vmem [#allocation5], %s166
        %v168 = vld [vmem:[%s167] sm:$0x1]
        %169 = vst [vmem:[#allocation2 + $0x2] sm:$0x1] %v168
        %s170 = sadd.s32 %s155, 3
        %s171 = sld [smem:[#allocation4 + %s170]]
        %s172 = scalar_lea.vmem [#allocation5], %s171
        %v173 = vld [vmem:[%s172] sm:$0x1]
        %174 = vst [vmem:[#allocation2 + $0x3] sm:$0x1] %v173
        %s175 = sadd.s32 %s155, 4
        %s176 = sld [smem:[#allocation4 + %s175]]
        %s177 = scalar_lea.vmem [#allocation5], %s176
        %v178 = vld [vmem:[%s177] sm:$0x1]
        %179 = vst [vmem:[#allocation2 + $0x4] sm:$0x1] %v178
        %s180 = sadd.s32 %s155, 5
        %s181 = sld [smem:[#allocation4 + %s180]]
        %s182 = scalar_lea.vmem [#allocation5], %s181
        %v183 = vld [vmem:[%s182] sm:$0x1]
        %184 = vst [vmem:[#allocation2 + $0x5] sm:$0x1] %v183
        %s185 = sadd.s32 %s155, 6
        %s186 = sld [smem:[#allocation4 + %s185]]
        %s187 = scalar_lea.vmem [#allocation5], %s186
        %v188 = vld [vmem:[%s187] sm:$0x1]
        %189 = vst [vmem:[#allocation2 + $0x6] sm:$0x1] %v188
        %s190 = sadd.s32 %s155, 7
        %s191 = sld [smem:[#allocation4 + %s190]]
        %s192 = scalar_lea.vmem [#allocation5], %s191
        %v193 = vld [vmem:[%s192] sm:$0x1]
        %194 = vst [vmem:[#allocation2 + $0x7] sm:$0x1] %v193
        %v195 = vld [vmem:[#allocation2] sm:$0xff]
        %v196 = vld [vmem:[#allocation8] sm:$0xff]
        %v197 = vadd.f32 %v195, %v196
        %198 = vst [vmem:[%s154] sm:$0xff] %v197
        %s199 = sand.u32 %s73, 1
        %s200 = scalar_lea.sflag [#allocation7], %s199
        %s201 = sand.u32 %s73, 1
        %s202 = smul.addr %s201, 8
        %s203 = scalar_lea.vmem [#allocation10], %s202
        // Predicated region
        $region37: #{tpu_custom_call.1} parent=27 // pred_check
          %p204 = pneg %p83
        $region38: #{tpu_custom_call.1} parent=27 // pred_check_branch
          %206 = sbr.rel (%p204) target = $region40
        $region39: #{tpu_custom_call.1} parent=27 // pred_region
          %s208 = ssub.s32 128, 128
          %209 = vsyncadd %s200, %s208
          %s210 = smul.addr %s23, 128
          %s211 = scalar_lea.hbm %s3, %s210
          %s213 = sshll.u32 %s203, 4
          %s214 = int_to_ptr.vmem [resolvable:$true] %s213
          %216 = dma.vmem_to_hbm [thread:$0]  %s214, 128, %s211, %s200
        $region40: #{tpu_custom_call.1} parent=27 // pred_fallthru
          _
      $region28: #{tpu_custom_call.1} parent=5 // pred_fallthru
        _
      %p217 = scmp.le.s32.totalorder 2, %s18
      // Predicated region
      $region41: #{tpu_custom_call.1} parent=5 // pred_check
        %p218 = pneg %p217
      $region42: #{tpu_custom_call.1} parent=5 // pred_check_branch
        %220 = sbr.rel (%p218) target = $region44
      $region43: #{tpu_custom_call.1} parent=5 // pred_region
        %s221 = ssub.s32 %s18, 2
        // Predicated region
        $region45: #{tpu_custom_call.1} parent=43 // pred_check
          %p222 = pneg %p89
        $region46: #{tpu_custom_call.1} parent=43 // pred_check_branch
          %224 = sbr.rel (%p222) target = $region48
        $region47: #{tpu_custom_call.1} parent=43 // pred_region
          %s225 = sand.u32 %s74, 1
          %s226 = scalar_lea.sflag [#allocation7], %s225
          %s227 = sand.u32 %s74, 1
          %s228 = smul.addr %s227, 8
          %s229 = scalar_lea.vmem [#allocation10], %s228
          %230 = dma.done %s226, 128
        $region48: #{tpu_custom_call.1} parent=43 // pred_fallthru
          _
      $region44: #{tpu_custom_call.1} parent=5 // pred_fallthru
        _
    $region6: #{tpu_custom_call.1} parent=1 // loop_footer
      %s22 = sadd.s32 1, %s18
    $region7: #{tpu_custom_call.1} parent=1 // loop_footer_branch
      %17 = sbr.rel target = $region3
    $region8: #{tpu_custom_call.1} parent=1 // loop_exit
      _
    %231 = vsyncpa [#allocation6], 1
    %s232 = scalar_lea.sflag [#allocation6], 1
    %233 = vsyncpa %s232, 1
    %234 = vsyncpa [#allocation9], 1
    %235 = vsyncpa [#allocation7], 1
    %s236 = scalar_lea.sflag [#allocation7], 1
    %237 = vsyncpa %s236, 1

</llo_original>
